<compile_context>
chip_gen: v7x
topology: tpu7x:2x2x1
jax: 0.10.0
libtpu: 0.0.40
codegen_flags: <defaults>
</compile_context>

<pallas_src>
import functools
import math

import jax
import jax.numpy as jnp
from jax.experimental import pallas as pl
from jax.experimental.pallas import tpu as pltpu


# ---------------------------------------------------------------------------
# small helpers
# ---------------------------------------------------------------------------

def _largest_divisor_tile(dim: int, max_tile: int) -> int:
    """Largest tile <= max_tile dividing dim, preferring sublane multiples of 8."""
    t = min(dim, max_tile)
    cand = t - (t % 8)
    while cand >= 8:
        if dim % cand == 0:
            return cand
        cand -= 8
    t = min(dim, max_tile)
    while dim % t:
        t -= 1
    return t


def make_sinusoidal_pos_table(max_len, d_model):
    pos = jnp.arange(max_len, dtype=jnp.float32)[:, None]
    i = jnp.arange(0, d_model, 2, dtype=jnp.float32)
    div = jnp.exp(-math.log(10000.0) * i / d_model)
    ang = pos * div
    pe = jnp.zeros((max_len, d_model), jnp.float32)
    pe = pe.at[:, 0::2].set(jnp.sin(ang))
    pe = pe.at[:, 1::2].set(jnp.cos(ang))
    return pe


# ---------------------------------------------------------------------------
# 1) Embedding kernel: DMA row-gather + pos add + *sqrt(D) + (optional) dropout
# ---------------------------------------------------------------------------

def _embedding_kernel(tok_ref, wemb_hbm, pos_ref, *rest, ts, vocab, scale, has_mask):
    if has_mask:
        mask_ref, out_ref, gather_buf, sems = rest
    else:
        out_ref, gather_buf, sems = rest

    b = pl.program_id(0)
    base = pl.program_id(1) * ts

    # Gather the `ts` needed word-embedding rows straight from HBM into VMEM.
    # All row DMAs are started before any wait so they overlap each other.
    # Out-of-range token ids are clamped (PyTorch would raise; documented behavior).
    copies = []
    for r in range(ts):
        tok = jnp.clip(tok_ref[b, base + r], 0, vocab - 1)
        cp = pltpu.make_async_copy(wemb_hbm.at[pl.ds(tok, 1), :],
                                   gather_buf.at[pl.ds(r, 1), :],
                                   sems.at[r])
        cp.start()
        copies.append(cp)
    for cp in copies:
        cp.wait()
    # TODO(synk): double-buffer the gather scratch across S-tiles to overlap the
    # row DMAs of tile i+1 with the compute of tile i.

    val = (gather_buf[...] + pos_ref[...]) * jnp.float32(scale)
    if has_mask:
        val = val * mask_ref[0]          # mask already scaled by 1/(1-p)
    out_ref[0] = val.astype(out_ref.dtype)


def embedding_forward(tokens, word_table, pos_table, *, dropout_p=0.0,
                      dropout_key=None, ts_max=128):
    """tokens [B,S] int32, word_table [V,D], pos_table [max_len,D] -> [B,S,D] f32."""
    B, S = tokens.shape
    V, D = word_table.shape
    assert D % 128 == 0, "pad d_model to a multiple of 128 for lane-dense stores"
    ts = _largest_divisor_tile(S, ts_max)
    pos = pos_table[:S]                                    # [S, D] (wrapper glue)
    has_mask = (dropout_p > 0.0) and (dropout_key is not None)

    inputs = [tokens.astype(jnp.int32), word_table, pos]
    in_specs = [
        pl.BlockSpec(memory_space=pl.ANY),                 # word table stays in HBM
        pl.BlockSpec((ts, D), lambda b, s, tok: (s, 0)),   # pos rows of this tile
    ]
    if has_mask:
        # TODO(synk): on TPU-only deployments generate this in-kernel with
        # pltpu.prng_random_bits (integer-domain threshold); the stateful TPU PRNG has
        # no CPU/interpret lowering, so the mask is produced host-side for portability.
        keep = jax.random.bernoulli(dropout_key, 1.0 - dropout_p, (B, S, D))
        mask = keep.astype(jnp.float32) * jnp.float32(1.0 / (1.0 - dropout_p))
        inputs.append(mask)
        in_specs.append(pl.BlockSpec((1, ts, D), lambda b, s, tok: (b, s, 0)))

    kernel = functools.partial(_embedding_kernel, ts=ts, vocab=V,
                               scale=math.sqrt(D), has_mask=has_mask)
    return pl.pallas_call(
        kernel,
        out_shape=jax.ShapeDtypeStruct((B, S, D), jnp.float32),
        grid_spec=pltpu.PrefetchScalarGridSpec(
            num_scalar_prefetch=1,                         # token ids -> SMEM
            grid=(B, S // ts),
            in_specs=in_specs,
            out_specs=pl.BlockSpec((1, ts, D), lambda b, s, tok: (b, s, 0)),
            scratch_shapes=[pltpu.VMEM((ts, D), jnp.float32),
                            pltpu.SemaphoreType.DMA((ts,))],
        ),
        compiler_params=pltpu.CompilerParams(
            dimension_semantics=("parallel", "arbitrary"),
            vmem_limit_bytes=32 * 1024 * 1024),
    )(*inputs)


# ---------------------------------------------------------------------------
# 2) Fused self-attention block:
#    LayerNorm1( x + OutProj( MHA( QKVProj(x) ) ) ), one batch element per grid step
# ---------------------------------------------------------------------------

def _attn_block_kernel(x_ref, wqkv_ref, bqkv_ref, wo_ref, bo_ref, g_ref, beta_ref,
                       o_ref, *, n_head, hd, eps):
    x = x_ref[0]                                           # [S, D]
    D = n_head * hd
    qkv = jnp.dot(x, wqkv_ref[...], preferred_element_type=jnp.float32) + bqkv_ref[...]
    q = qkv[:, :D]
    k = qkv[:, D:2 * D]
    v = qkv[:, 2 * D:]

    scale = jnp.float32(1.0 / math.sqrt(hd))
    head_outs = []
    for h in range(n_head):
        lo, hi = h * hd, (h + 1) * hd
        qh, kh, vh = q[:, lo:hi], k[:, lo:hi], v[:, lo:hi]
        s = jnp.dot(qh, kh.T, preferred_element_type=jnp.float32) * scale
        m = jnp.max(s, axis=-1, keepdims=True)
        p = jnp.exp(s - m)
        l = jnp.sum(p, axis=-1, keepdims=True)
        head_outs.append(jnp.dot(p / l, vh, preferred_element_type=jnp.float32))
    attn = jnp.concatenate(head_outs, axis=-1)             # [S, D], lane-dense

    proj = jnp.dot(attn, wo_ref[...], preferred_element_type=jnp.float32) + bo_ref[...]

    r = x + proj                                           # residual
    mu = jnp.mean(r, axis=-1, keepdims=True)
    c = r - mu
    var = jnp.mean(c * c, axis=-1, keepdims=True)
    inv = jax.lax.rsqrt(var + jnp.float32(eps))
    o_ref[0] = (c * inv * g_ref[...] + beta_ref[...]).astype(o_ref.dtype)


def attention_block(x, wqkv, bqkv, wo, bo, gamma, beta, *, n_head, eps=1e-5):
    """x [B,S,D] -> LayerNorm1(x + MHA(x)), [B,S,D]."""
    B, S, D = x.shape
    hd = D // n_head
    # TODO(synk): for long sequences tile the query axis and use flash-style online
    # softmax with KV streaming; at these sizes one batch element per grid step is fine.
    kernel = functools.partial(_attn_block_kernel, n_head=n_head, hd=hd, eps=eps)
    x_spec = pl.BlockSpec((1, S, D), lambda b: (b, 0, 0))
    return pl.pallas_call(
        kernel,
        out_shape=jax.ShapeDtypeStruct((B, S, D), jnp.float32),
        grid=(B,),
        in_specs=[
            x_spec,
            pl.BlockSpec((D, 3 * D), lambda b: (0, 0)),    # in_proj weight (resident)
            pl.BlockSpec((1, 3 * D), lambda b: (0, 0)),
            pl.BlockSpec((D, D), lambda b: (0, 0)),        # out_proj weight (resident)
            pl.BlockSpec((1, D), lambda b: (0, 0)),
            pl.BlockSpec((1, D), lambda b: (0, 0)),        # ln1 gamma
            pl.BlockSpec((1, D), lambda b: (0, 0)),        # ln1 beta
        ],
        out_specs=x_spec,
        compiler_params=pltpu.CompilerParams(
            dimension_semantics=("parallel",),
            vmem_limit_bytes=64 * 1024 * 1024),
    )(x, wqkv, bqkv.reshape(1, -1), wo, bo.reshape(1, -1),
      gamma.reshape(1, -1), beta.reshape(1, -1))


# ---------------------------------------------------------------------------
# 3) Fused feed-forward block:
#    LayerNorm2( x + W2 @ ReLU(W1 @ x + b1) + b2 ), one row-tile per grid step
# ---------------------------------------------------------------------------

def _ffn_block_kernel(x_ref, w1_ref, b1_ref, w2_ref, b2_ref, g_ref, beta_ref,
                      o_ref, *, eps):
    x = x_ref[...]                                         # [tm, D]
    h = jnp.dot(x, w1_ref[...], preferred_element_type=jnp.float32) + b1_ref[...]
    h = jnp.maximum(h, 0.0)
    y = jnp.dot(h, w2_ref[...], preferred_element_type=jnp.float32) + b2_ref[...]

    r = x + y                                              # residual
    mu = jnp.mean(r, axis=-1, keepdims=True)
    c = r - mu
    var = jnp.mean(c * c, axis=-1, keepdims=True)
    inv = jax.lax.rsqrt(var + jnp.float32(eps))
    o_ref[...] = (c * inv * g_ref[...] + beta_ref[...]).astype(o_ref.dtype)


def ffn_block(x, w1, b1, w2, b2, gamma, beta, *, eps=1e-5, tm_max=256):
    """x [M,D] -> LayerNorm2(x + FF(x)), [M,D].  Hidden [M, d_ff] never touches HBM."""
    M, D = x.shape
    dff = w1.shape[1]
    tm = _largest_divisor_tile(M, tm_max)
    # TODO(synk): tile the d_ff axis with a VMEM accumulator if W1/W2 outgrow VMEM.
    kernel = functools.partial(_ffn_block_kernel, eps=eps)
    return pl.pallas_call(
        kernel,
        out_shape=jax.ShapeDtypeStruct((M, D), jnp.float32),
        grid=(M // tm,),
        in_specs=[
            pl.BlockSpec((tm, D), lambda i: (i, 0)),
            pl.BlockSpec((D, dff), lambda i: (0, 0)),      # W1 resident across tiles
            pl.BlockSpec((1, dff), lambda i: (0, 0)),
            pl.BlockSpec((dff, D), lambda i: (0, 0)),      # W2 resident across tiles
            pl.BlockSpec((1, D), lambda i: (0, 0)),
            pl.BlockSpec((1, D), lambda i: (0, 0)),        # ln2 gamma
            pl.BlockSpec((1, D), lambda i: (0, 0)),        # ln2 beta
        ],
        out_specs=pl.BlockSpec((tm, D), lambda i: (i, 0)),
        compiler_params=pltpu.CompilerParams(
            dimension_semantics=("parallel",),
            vmem_limit_bytes=100 * 1024 * 1024),
    )(x, w1, b1.reshape(1, -1), w2, b2.reshape(1, -1),
      gamma.reshape(1, -1), beta.reshape(1, -1))


# ---------------------------------------------------------------------------
# Full Encoder forward (3 fused Pallas kernels; reshapes are wrapper glue)
# ---------------------------------------------------------------------------

def encoder_forward(tokens, params, *, dropout_p=0.0, dropout_key=None):
    B, S = tokens.shape
    D = params["word_table"].shape[1]
    n_head = params["n_head"]

    # Embedding: (word + pos) * sqrt(D), then dropout (as in the PyTorch module).
    x = embedding_forward(tokens, params["word_table"], params["pos_table"],
                          dropout_p=dropout_p, dropout_key=dropout_key)   # [B,S,D]

    # Self-attention + residual + LayerNorm1, fused per batch element.
    x = attention_block(x, params["in_proj_w"], params["in_proj_b"],
                        params["out_proj_w"], params["out_proj_b"],
                        params["ln1_g"], params["ln1_b"], n_head=n_head)  # [B,S,D]

    # FeedForward + residual + LayerNorm2, fused per row tile.
    x = ffn_block(x.reshape(B * S, D), params["ff_w1"], params["ff_b1"],
                  params["ff_w2"], params["ff_b2"],
                  params["ln2_g"], params["ln2_b"])                       # [B*S,D]
    return x.reshape(B, S, D)


# ---------------------------------------------------------------------------
# Pure-JAX reference (eval mode / dropout off)
# ---------------------------------------------------------------------------

def _layer_norm_ref(x, g, b, eps=1e-5):
    mu = jnp.mean(x, axis=-1, keepdims=True)
    var = jnp.mean((x - mu) ** 2, axis=-1, keepdims=True)
    return (x - mu) * jax.lax.rsqrt(var + eps) * g + b


def reference_encoder(tokens, params):
    B, S = tokens.shape
    D = params["word_table"].shape[1]
    n_head = params["n_head"]
    hd = D // n_head
    x = (params["word_table"][tokens] + params["pos_table"][:S][None]) \
        * jnp.sqrt(jnp.float32(D))
    x = x.reshape(B * S, D)
    qkv = x @ params["in_proj_w"] + params["in_proj_b"]
    q, k, v = jnp.split(qkv, 3, axis=-1)

    def to_heads(t):
        return t.reshape(B, S, n_head, hd).transpose(0, 2, 1, 3)

    q, k, v = to_heads(q), to_heads(k), to_heads(v)
    s = jnp.einsum("bhqd,bhkd->bhqk", q, k) / jnp.sqrt(jnp.float32(hd))
    a = jax.nn.softmax(s, axis=-1)
    o = jnp.einsum("bhqk,bhkd->bhqd", a, v).transpose(0, 2, 1, 3).reshape(B * S, D)
    o = o @ params["out_proj_w"] + params["out_proj_b"]
    x = _layer_norm_ref(x + o, params["ln1_g"], params["ln1_b"])
    ff = jnp.maximum(x @ params["ff_w1"] + params["ff_b1"], 0.0)
    ff = ff @ params["ff_w2"] + params["ff_b2"]
    x = _layer_norm_ref(x + ff, params["ln2_g"], params["ln2_b"])
    return x.reshape(B, S, D)


# ---------------------------------------------------------------------------
# demo / self-check
# ---------------------------------------------------------------------------

if __name__ == "__main__":
    B, S = 2, 8
    vocab_size, d_model, n_head, max_len = 64, 128, 4, 16   # D multiple of 128 (lane-dense)
    d_ff = 2048                                              # hard-coded in FeedForward
    dropout_prop = 0.1

    key = jax.random.PRNGKey(0)
    ks = jax.random.split(key, 10)

    def w_init(k, shape):
        return 0.02 * jax.random.normal(k, shape, jnp.float32)

    def b_init(k, shape):
        return 0.02 * jax.random.normal(k, shape, jnp.float32)

    params = {
        "n_head": n_head,
        "word_table": jax.random.normal(ks[0], (vocab_size, d_model), jnp.float32),
        "pos_table": make_sinusoidal_pos_table(max_len, d_model),
        "in_proj_w": w_init(ks[1], (d_model, 3 * d_model)),
        "in_proj_b": b_init(ks[2], (3 * d_model,)),
        "out_proj_w": w_init(ks[3], (d_model, d_model)),
        "out_proj_b": b_init(ks[4], (d_model,)),
        "ln1_g": jnp.ones((d_model,), jnp.float32),
        "ln1_b": jnp.zeros((d_model,), jnp.float32),
        "ff_w1": w_init(ks[5], (d_model, d_ff)),
        "ff_b1": b_init(ks[6], (d_ff,)),
        "ff_w2": w_init(ks[7], (d_ff, d_model)),
        "ff_b2": b_init(ks[8], (d_model,)),
        "ln2_g": jnp.ones((d_model,), jnp.float32),
        "ln2_b": jnp.zeros((d_model,), jnp.float32),
    }
    tokens = jax.random.randint(ks[9], (B, S), 0, vocab_size, dtype=jnp.int32)

    # 1) Eval mode (dropout off): must match the pure-JAX reference.
    out = encoder_forward(tokens, params, dropout_p=0.0)
    out = jax.block_until_ready(out)
    ref = reference_encoder(tokens, params)
    assert out.shape == (B, S, d_model)
    assert bool(jnp.all(jnp.isfinite(out)))
    err = float(jnp.max(jnp.abs(out - ref)))
    assert jnp.allclose(out, ref, atol=3e-2, rtol=3e-2), f"max abs err {err}"

    # 2) Training mode (dropout on in the embedding, deterministic mask).
    out_train = encoder_forward(tokens, params, dropout_p=dropout_prop,
                                dropout_key=jax.random.PRNGKey(42))
    out_train = jax.block_until_ready(out_train)
    assert out_train.shape == (B, S, d_model)
    assert bool(jnp.all(jnp.isfinite(out_train)))

    print("KERNEL_OK")
</pallas_src>

<mosaic_0001>
module attributes {stable_mosaic.version = 11 : i64} {
  func.func @_embedding_kernel(%arg0: i32, %arg1: i32, %arg2: memref<2x8xi32, #tpu.memory_space<smem>>, %arg3: memref<64x128xf32, #tpu.memory_space<any>>, %arg4: memref<8x128xf32, #tpu.memory_space<vmem>>, %arg5: memref<1x8x128xf32, #tpu.memory_space<vmem>>, %arg6: memref<8x128xf32, #tpu.memory_space<vmem>>, %arg7: memref<8x!tpu.dma_semaphore, #tpu.memory_space<semaphore_mem>>) attributes {dimension_semantics = [#tpu.dimension_semantics<parallel>, #tpu.dimension_semantics<arbitrary>], iteration_bounds = array<i64: 2, 1>, scalar_prefetch = 1 : i64, scratch_operands = 2 : i64, tpu.core_type = #tpu.core_type<tc>, window_params = [{}, {transform_indices = @transform_1, window_bounds = array<i64: 8, 128>}, {transform_indices = @transform_2, window_bounds = array<i64: 1, 8, 128>}]} {
    %c8_i32 = arith.constant 8 : i32
    %0 = arith.muli %arg1, %c8_i32 : i32
    %c0_i32 = arith.constant 0 : i32
    %1 = arith.addi %0, %c0_i32 : i32
    %2 = arith.index_cast %arg0 : i32 to index
    %3 = arith.index_cast %1 : i32 to index
    %4 = memref.load %arg2[%2, %3] : memref<2x8xi32, #tpu.memory_space<smem>>
    %c0_i32_0 = arith.constant 0 : i32
    %c63_i32 = arith.constant 63 : i32
    %5 = arith.maxsi %c0_i32_0, %4 : i32
    %6 = arith.minsi %c63_i32, %5 : i32
    %c0_i32_1 = arith.constant 0 : i32
    %c0_i32_2 = arith.constant 0 : i32
    %7 = tpu.memref_slice %arg3[%6, %c0_i32_2] : memref<64x128xf32, #tpu.memory_space<any>> -> memref<1x128xf32, #tpu.memory_space<any>>
    %c0_i32_3 = arith.constant 0 : i32
    %c0_i32_4 = arith.constant 0 : i32
    %8 = tpu.memref_slice %arg6[%c0_i32_3, %c0_i32_4] : memref<8x128xf32, #tpu.memory_space<vmem>> -> memref<1x128xf32, #tpu.memory_space<vmem>>
    %9 = tpu.memref_slice %arg7[%c0_i32_1] : memref<8x!tpu.dma_semaphore, #tpu.memory_space<semaphore_mem>> -> memref<1x!tpu.dma_semaphore, #tpu.memory_space<semaphore_mem>>
    %10 = tpu.memref_squeeze %9 : memref<1x!tpu.dma_semaphore, #tpu.memory_space<semaphore_mem>> -> memref<!tpu.dma_semaphore, #tpu.memory_space<semaphore_mem>>
    tpu.enqueue_dma source(%7 : memref<1x128xf32, #tpu.memory_space<any>>) target(%8 : memref<1x128xf32, #tpu.memory_space<vmem>>) target_semaphore(%10 : memref<!tpu.dma_semaphore, #tpu.memory_space<semaphore_mem>>)
    %c1_i32 = arith.constant 1 : i32
    %11 = arith.addi %0, %c1_i32 : i32
    %12 = arith.index_cast %arg0 : i32 to index
    %13 = arith.index_cast %11 : i32 to index
    %14 = memref.load %arg2[%12, %13] : memref<2x8xi32, #tpu.memory_space<smem>>
    %c0_i32_5 = arith.constant 0 : i32
    %c63_i32_6 = arith.constant 63 : i32
    %15 = arith.maxsi %c0_i32_5, %14 : i32
    %16 = arith.minsi %c63_i32_6, %15 : i32
    %c1_i32_7 = arith.constant 1 : i32
    %c0_i32_8 = arith.constant 0 : i32
    %17 = tpu.memref_slice %arg3[%16, %c0_i32_8] : memref<64x128xf32, #tpu.memory_space<any>> -> memref<1x128xf32, #tpu.memory_space<any>>
    %c1_i32_9 = arith.constant 1 : i32
    %c0_i32_10 = arith.constant 0 : i32
    %18 = tpu.memref_slice %arg6[%c1_i32_9, %c0_i32_10] : memref<8x128xf32, #tpu.memory_space<vmem>> -> memref<1x128xf32, #tpu.memory_space<vmem>>
    %19 = tpu.memref_slice %arg7[%c1_i32_7] : memref<8x!tpu.dma_semaphore, #tpu.memory_space<semaphore_mem>> -> memref<1x!tpu.dma_semaphore, #tpu.memory_space<semaphore_mem>>
    %20 = tpu.memref_squeeze %19 : memref<1x!tpu.dma_semaphore, #tpu.memory_space<semaphore_mem>> -> memref<!tpu.dma_semaphore, #tpu.memory_space<semaphore_mem>>
    tpu.enqueue_dma source(%17 : memref<1x128xf32, #tpu.memory_space<any>>) target(%18 : memref<1x128xf32, #tpu.memory_space<vmem>>) target_semaphore(%20 : memref<!tpu.dma_semaphore, #tpu.memory_space<semaphore_mem>>)
    %c2_i32 = arith.constant 2 : i32
    %21 = arith.addi %0, %c2_i32 : i32
    %22 = arith.index_cast %arg0 : i32 to index
    %23 = arith.index_cast %21 : i32 to index
    %24 = memref.load %arg2[%22, %23] : memref<2x8xi32, #tpu.memory_space<smem>>
    %c0_i32_11 = arith.constant 0 : i32
    %c63_i32_12 = arith.constant 63 : i32
    %25 = arith.maxsi %c0_i32_11, %24 : i32
    %26 = arith.minsi %c63_i32_12, %25 : i32
    %c2_i32_13 = arith.constant 2 : i32
    %c0_i32_14 = arith.constant 0 : i32
    %27 = tpu.memref_slice %arg3[%26, %c0_i32_14] : memref<64x128xf32, #tpu.memory_space<any>> -> memref<1x128xf32, #tpu.memory_space<any>>
    %c2_i32_15 = arith.constant 2 : i32
    %c0_i32_16 = arith.constant 0 : i32
    %28 = tpu.memref_slice %arg6[%c2_i32_15, %c0_i32_16] : memref<8x128xf32, #tpu.memory_space<vmem>> -> memref<1x128xf32, #tpu.memory_space<vmem>>
    %29 = tpu.memref_slice %arg7[%c2_i32_13] : memref<8x!tpu.dma_semaphore, #tpu.memory_space<semaphore_mem>> -> memref<1x!tpu.dma_semaphore, #tpu.memory_space<semaphore_mem>>
    %30 = tpu.memref_squeeze %29 : memref<1x!tpu.dma_semaphore, #tpu.memory_space<semaphore_mem>> -> memref<!tpu.dma_semaphore, #tpu.memory_space<semaphore_mem>>
    tpu.enqueue_dma source(%27 : memref<1x128xf32, #tpu.memory_space<any>>) target(%28 : memref<1x128xf32, #tpu.memory_space<vmem>>) target_semaphore(%30 : memref<!tpu.dma_semaphore, #tpu.memory_space<semaphore_mem>>)
    %c3_i32 = arith.constant 3 : i32
    %31 = arith.addi %0, %c3_i32 : i32
    %32 = arith.index_cast %arg0 : i32 to index
    %33 = arith.index_cast %31 : i32 to index
    %34 = memref.load %arg2[%32, %33] : memref<2x8xi32, #tpu.memory_space<smem>>
    %c0_i32_17 = arith.constant 0 : i32
    %c63_i32_18 = arith.constant 63 : i32
    %35 = arith.maxsi %c0_i32_17, %34 : i32
    %36 = arith.minsi %c63_i32_18, %35 : i32
    %c3_i32_19 = arith.constant 3 : i32
    %c0_i32_20 = arith.constant 0 : i32
    %37 = tpu.memref_slice %arg3[%36, %c0_i32_20] : memref<64x128xf32, #tpu.memory_space<any>> -> memref<1x128xf32, #tpu.memory_space<any>>
    %c3_i32_21 = arith.constant 3 : i32
    %c0_i32_22 = arith.constant 0 : i32
    %38 = tpu.memref_slice %arg6[%c3_i32_21, %c0_i32_22] : memref<8x128xf32, #tpu.memory_space<vmem>> -> memref<1x128xf32, #tpu.memory_space<vmem>>
    %39 = tpu.memref_slice %arg7[%c3_i32_19] : memref<8x!tpu.dma_semaphore, #tpu.memory_space<semaphore_mem>> -> memref<1x!tpu.dma_semaphore, #tpu.memory_space<semaphore_mem>>
    %40 = tpu.memref_squeeze %39 : memref<1x!tpu.dma_semaphore, #tpu.memory_space<semaphore_mem>> -> memref<!tpu.dma_semaphore, #tpu.memory_space<semaphore_mem>>
    tpu.enqueue_dma source(%37 : memref<1x128xf32, #tpu.memory_space<any>>) target(%38 : memref<1x128xf32, #tpu.memory_space<vmem>>) target_semaphore(%40 : memref<!tpu.dma_semaphore, #tpu.memory_space<semaphore_mem>>)
    %c4_i32 = arith.constant 4 : i32
    %41 = arith.addi %0, %c4_i32 : i32
    %42 = arith.index_cast %arg0 : i32 to index
    %43 = arith.index_cast %41 : i32 to index
    %44 = memref.load %arg2[%42, %43] : memref<2x8xi32, #tpu.memory_space<smem>>
    %c0_i32_23 = arith.constant 0 : i32
    %c63_i32_24 = arith.constant 63 : i32
    %45 = arith.maxsi %c0_i32_23, %44 : i32
    %46 = arith.minsi %c63_i32_24, %45 : i32
    %c4_i32_25 = arith.constant 4 : i32
    %c0_i32_26 = arith.constant 0 : i32
    %47 = tpu.memref_slice %arg3[%46, %c0_i32_26] : memref<64x128xf32, #tpu.memory_space<any>> -> memref<1x128xf32, #tpu.memory_space<any>>
    %c4_i32_27 = arith.constant 4 : i32
    %c0_i32_28 = arith.constant 0 : i32
    %48 = tpu.memref_slice %arg6[%c4_i32_27, %c0_i32_28] : memref<8x128xf32, #tpu.memory_space<vmem>> -> memref<1x128xf32, #tpu.memory_space<vmem>>
    %49 = tpu.memref_slice %arg7[%c4_i32_25] : memref<8x!tpu.dma_semaphore, #tpu.memory_space<semaphore_mem>> -> memref<1x!tpu.dma_semaphore, #tpu.memory_space<semaphore_mem>>
    %50 = tpu.memref_squeeze %49 : memref<1x!tpu.dma_semaphore, #tpu.memory_space<semaphore_mem>> -> memref<!tpu.dma_semaphore, #tpu.memory_space<semaphore_mem>>
    tpu.enqueue_dma source(%47 : memref<1x128xf32, #tpu.memory_space<any>>) target(%48 : memref<1x128xf32, #tpu.memory_space<vmem>>) target_semaphore(%50 : memref<!tpu.dma_semaphore, #tpu.memory_space<semaphore_mem>>)
    %c5_i32 = arith.constant 5 : i32
    %51 = arith.addi %0, %c5_i32 : i32
    %52 = arith.index_cast %arg0 : i32 to index
    %53 = arith.index_cast %51 : i32 to index
    %54 = memref.load %arg2[%52, %53] : memref<2x8xi32, #tpu.memory_space<smem>>
    %c0_i32_29 = arith.constant 0 : i32
    %c63_i32_30 = arith.constant 63 : i32
    %55 = arith.maxsi %c0_i32_29, %54 : i32
    %56 = arith.minsi %c63_i32_30, %55 : i32
    %c5_i32_31 = arith.constant 5 : i32
    %c0_i32_32 = arith.constant 0 : i32
    %57 = tpu.memref_slice %arg3[%56, %c0_i32_32] : memref<64x128xf32, #tpu.memory_space<any>> -> memref<1x128xf32, #tpu.memory_space<any>>
    %c5_i32_33 = arith.constant 5 : i32
    %c0_i32_34 = arith.constant 0 : i32
    %58 = tpu.memref_slice %arg6[%c5_i32_33, %c0_i32_34] : memref<8x128xf32, #tpu.memory_space<vmem>> -> memref<1x128xf32, #tpu.memory_space<vmem>>
    %59 = tpu.memref_slice %arg7[%c5_i32_31] : memref<8x!tpu.dma_semaphore, #tpu.memory_space<semaphore_mem>> -> memref<1x!tpu.dma_semaphore, #tpu.memory_space<semaphore_mem>>
    %60 = tpu.memref_squeeze %59 : memref<1x!tpu.dma_semaphore, #tpu.memory_space<semaphore_mem>> -> memref<!tpu.dma_semaphore, #tpu.memory_space<semaphore_mem>>
    tpu.enqueue_dma source(%57 : memref<1x128xf32, #tpu.memory_space<any>>) target(%58 : memref<1x128xf32, #tpu.memory_space<vmem>>) target_semaphore(%60 : memref<!tpu.dma_semaphore, #tpu.memory_space<semaphore_mem>>)
    %c6_i32 = arith.constant 6 : i32
    %61 = arith.addi %0, %c6_i32 : i32
    %62 = arith.index_cast %arg0 : i32 to index
    %63 = arith.index_cast %61 : i32 to index
    %64 = memref.load %arg2[%62, %63] : memref<2x8xi32, #tpu.memory_space<smem>>
    %c0_i32_35 = arith.constant 0 : i32
    %c63_i32_36 = arith.constant 63 : i32
    %65 = arith.maxsi %c0_i32_35, %64 : i32
    %66 = arith.minsi %c63_i32_36, %65 : i32
    %c6_i32_37 = arith.constant 6 : i32
    %c0_i32_38 = arith.constant 0 : i32
    %67 = tpu.memref_slice %arg3[%66, %c0_i32_38] : memref<64x128xf32, #tpu.memory_space<any>> -> memref<1x128xf32, #tpu.memory_space<any>>
    %c6_i32_39 = arith.constant 6 : i32
    %c0_i32_40 = arith.constant 0 : i32
    %68 = tpu.memref_slice %arg6[%c6_i32_39, %c0_i32_40] : memref<8x128xf32, #tpu.memory_space<vmem>> -> memref<1x128xf32, #tpu.memory_space<vmem>>
    %69 = tpu.memref_slice %arg7[%c6_i32_37] : memref<8x!tpu.dma_semaphore, #tpu.memory_space<semaphore_mem>> -> memref<1x!tpu.dma_semaphore, #tpu.memory_space<semaphore_mem>>
    %70 = tpu.memref_squeeze %69 : memref<1x!tpu.dma_semaphore, #tpu.memory_space<semaphore_mem>> -> memref<!tpu.dma_semaphore, #tpu.memory_space<semaphore_mem>>
    tpu.enqueue_dma source(%67 : memref<1x128xf32, #tpu.memory_space<any>>) target(%68 : memref<1x128xf32, #tpu.memory_space<vmem>>) target_semaphore(%70 : memref<!tpu.dma_semaphore, #tpu.memory_space<semaphore_mem>>)
    %c7_i32 = arith.constant 7 : i32
    %71 = arith.addi %0, %c7_i32 : i32
    %72 = arith.index_cast %arg0 : i32 to index
    %73 = arith.index_cast %71 : i32 to index
    %74 = memref.load %arg2[%72, %73] : memref<2x8xi32, #tpu.memory_space<smem>>
    %c0_i32_41 = arith.constant 0 : i32
    %c63_i32_42 = arith.constant 63 : i32
    %75 = arith.maxsi %c0_i32_41, %74 : i32
    %76 = arith.minsi %c63_i32_42, %75 : i32
    %c7_i32_43 = arith.constant 7 : i32
    %c0_i32_44 = arith.constant 0 : i32
    %77 = tpu.memref_slice %arg3[%76, %c0_i32_44] : memref<64x128xf32, #tpu.memory_space<any>> -> memref<1x128xf32, #tpu.memory_space<any>>
    %c7_i32_45 = arith.constant 7 : i32
    %c0_i32_46 = arith.constant 0 : i32
    %78 = tpu.memref_slice %arg6[%c7_i32_45, %c0_i32_46] : memref<8x128xf32, #tpu.memory_space<vmem>> -> memref<1x128xf32, #tpu.memory_space<vmem>>
    %79 = tpu.memref_slice %arg7[%c7_i32_43] : memref<8x!tpu.dma_semaphore, #tpu.memory_space<semaphore_mem>> -> memref<1x!tpu.dma_semaphore, #tpu.memory_space<semaphore_mem>>
    %80 = tpu.memref_squeeze %79 : memref<1x!tpu.dma_semaphore, #tpu.memory_space<semaphore_mem>> -> memref<!tpu.dma_semaphore, #tpu.memory_space<semaphore_mem>>
    tpu.enqueue_dma source(%77 : memref<1x128xf32, #tpu.memory_space<any>>) target(%78 : memref<1x128xf32, #tpu.memory_space<vmem>>) target_semaphore(%80 : memref<!tpu.dma_semaphore, #tpu.memory_space<semaphore_mem>>)
    %c0_i32_47 = arith.constant 0 : i32
    %c0_i32_48 = arith.constant 0 : i32
    %81 = tpu.memref_slice %arg3[%6, %c0_i32_48] : memref<64x128xf32, #tpu.memory_space<any>> -> memref<1x128xf32, #tpu.memory_space<any>>
    %c0_i32_49 = arith.constant 0 : i32
    %c0_i32_50 = arith.constant 0 : i32
    %82 = tpu.memref_slice %arg6[%c0_i32_49, %c0_i32_50] : memref<8x128xf32, #tpu.memory_space<vmem>> -> memref<1x128xf32, #tpu.memory_space<vmem>>
    %83 = tpu.memref_slice %arg7[%c0_i32_47] : memref<8x!tpu.dma_semaphore, #tpu.memory_space<semaphore_mem>> -> memref<1x!tpu.dma_semaphore, #tpu.memory_space<semaphore_mem>>
    %84 = tpu.memref_squeeze %83 : memref<1x!tpu.dma_semaphore, #tpu.memory_space<semaphore_mem>> -> memref<!tpu.dma_semaphore, #tpu.memory_space<semaphore_mem>>
    tpu.wait_dma2 semaphore(%84 : memref<!tpu.dma_semaphore, #tpu.memory_space<semaphore_mem>>) src(%81 : memref<1x128xf32, #tpu.memory_space<any>>) dst(%82 : memref<1x128xf32, #tpu.memory_space<vmem>>)
    %c1_i32_51 = arith.constant 1 : i32
    %c0_i32_52 = arith.constant 0 : i32
    %85 = tpu.memref_slice %arg3[%16, %c0_i32_52] : memref<64x128xf32, #tpu.memory_space<any>> -> memref<1x128xf32, #tpu.memory_space<any>>
    %c1_i32_53 = arith.constant 1 : i32
    %c0_i32_54 = arith.constant 0 : i32
    %86 = tpu.memref_slice %arg6[%c1_i32_53, %c0_i32_54] : memref<8x128xf32, #tpu.memory_space<vmem>> -> memref<1x128xf32, #tpu.memory_space<vmem>>
    %87 = tpu.memref_slice %arg7[%c1_i32_51] : memref<8x!tpu.dma_semaphore, #tpu.memory_space<semaphore_mem>> -> memref<1x!tpu.dma_semaphore, #tpu.memory_space<semaphore_mem>>
    %88 = tpu.memref_squeeze %87 : memref<1x!tpu.dma_semaphore, #tpu.memory_space<semaphore_mem>> -> memref<!tpu.dma_semaphore, #tpu.memory_space<semaphore_mem>>
    tpu.wait_dma2 semaphore(%88 : memref<!tpu.dma_semaphore, #tpu.memory_space<semaphore_mem>>) src(%85 : memref<1x128xf32, #tpu.memory_space<any>>) dst(%86 : memref<1x128xf32, #tpu.memory_space<vmem>>)
    %c2_i32_55 = arith.constant 2 : i32
    %c0_i32_56 = arith.constant 0 : i32
    %89 = tpu.memref_slice %arg3[%26, %c0_i32_56] : memref<64x128xf32, #tpu.memory_space<any>> -> memref<1x128xf32, #tpu.memory_space<any>>
    %c2_i32_57 = arith.constant 2 : i32
    %c0_i32_58 = arith.constant 0 : i32
    %90 = tpu.memref_slice %arg6[%c2_i32_57, %c0_i32_58] : memref<8x128xf32, #tpu.memory_space<vmem>> -> memref<1x128xf32, #tpu.memory_space<vmem>>
    %91 = tpu.memref_slice %arg7[%c2_i32_55] : memref<8x!tpu.dma_semaphore, #tpu.memory_space<semaphore_mem>> -> memref<1x!tpu.dma_semaphore, #tpu.memory_space<semaphore_mem>>
    %92 = tpu.memref_squeeze %91 : memref<1x!tpu.dma_semaphore, #tpu.memory_space<semaphore_mem>> -> memref<!tpu.dma_semaphore, #tpu.memory_space<semaphore_mem>>
    tpu.wait_dma2 semaphore(%92 : memref<!tpu.dma_semaphore, #tpu.memory_space<semaphore_mem>>) src(%89 : memref<1x128xf32, #tpu.memory_space<any>>) dst(%90 : memref<1x128xf32, #tpu.memory_space<vmem>>)
    %c3_i32_59 = arith.constant 3 : i32
    %c0_i32_60 = arith.constant 0 : i32
    %93 = tpu.memref_slice %arg3[%36, %c0_i32_60] : memref<64x128xf32, #tpu.memory_space<any>> -> memref<1x128xf32, #tpu.memory_space<any>>
    %c3_i32_61 = arith.constant 3 : i32
    %c0_i32_62 = arith.constant 0 : i32
    %94 = tpu.memref_slice %arg6[%c3_i32_61, %c0_i32_62] : memref<8x128xf32, #tpu.memory_space<vmem>> -> memref<1x128xf32, #tpu.memory_space<vmem>>
    %95 = tpu.memref_slice %arg7[%c3_i32_59] : memref<8x!tpu.dma_semaphore, #tpu.memory_space<semaphore_mem>> -> memref<1x!tpu.dma_semaphore, #tpu.memory_space<semaphore_mem>>
    %96 = tpu.memref_squeeze %95 : memref<1x!tpu.dma_semaphore, #tpu.memory_space<semaphore_mem>> -> memref<!tpu.dma_semaphore, #tpu.memory_space<semaphore_mem>>
    tpu.wait_dma2 semaphore(%96 : memref<!tpu.dma_semaphore, #tpu.memory_space<semaphore_mem>>) src(%93 : memref<1x128xf32, #tpu.memory_space<any>>) dst(%94 : memref<1x128xf32, #tpu.memory_space<vmem>>)
    %c4_i32_63 = arith.constant 4 : i32
    %c0_i32_64 = arith.constant 0 : i32
    %97 = tpu.memref_slice %arg3[%46, %c0_i32_64] : memref<64x128xf32, #tpu.memory_space<any>> -> memref<1x128xf32, #tpu.memory_space<any>>
    %c4_i32_65 = arith.constant 4 : i32
    %c0_i32_66 = arith.constant 0 : i32
    %98 = tpu.memref_slice %arg6[%c4_i32_65, %c0_i32_66] : memref<8x128xf32, #tpu.memory_space<vmem>> -> memref<1x128xf32, #tpu.memory_space<vmem>>
    %99 = tpu.memref_slice %arg7[%c4_i32_63] : memref<8x!tpu.dma_semaphore, #tpu.memory_space<semaphore_mem>> -> memref<1x!tpu.dma_semaphore, #tpu.memory_space<semaphore_mem>>
    %100 = tpu.memref_squeeze %99 : memref<1x!tpu.dma_semaphore, #tpu.memory_space<semaphore_mem>> -> memref<!tpu.dma_semaphore, #tpu.memory_space<semaphore_mem>>
    tpu.wait_dma2 semaphore(%100 : memref<!tpu.dma_semaphore, #tpu.memory_space<semaphore_mem>>) src(%97 : memref<1x128xf32, #tpu.memory_space<any>>) dst(%98 : memref<1x128xf32, #tpu.memory_space<vmem>>)
    %c5_i32_67 = arith.constant 5 : i32
    %c0_i32_68 = arith.constant 0 : i32
    %101 = tpu.memref_slice %arg3[%56, %c0_i32_68] : memref<64x128xf32, #tpu.memory_space<any>> -> memref<1x128xf32, #tpu.memory_space<any>>
    %c5_i32_69 = arith.constant 5 : i32
    %c0_i32_70 = arith.constant 0 : i32
    %102 = tpu.memref_slice %arg6[%c5_i32_69, %c0_i32_70] : memref<8x128xf32, #tpu.memory_space<vmem>> -> memref<1x128xf32, #tpu.memory_space<vmem>>
    %103 = tpu.memref_slice %arg7[%c5_i32_67] : memref<8x!tpu.dma_semaphore, #tpu.memory_space<semaphore_mem>> -> memref<1x!tpu.dma_semaphore, #tpu.memory_space<semaphore_mem>>
    %104 = tpu.memref_squeeze %103 : memref<1x!tpu.dma_semaphore, #tpu.memory_space<semaphore_mem>> -> memref<!tpu.dma_semaphore, #tpu.memory_space<semaphore_mem>>
    tpu.wait_dma2 semaphore(%104 : memref<!tpu.dma_semaphore, #tpu.memory_space<semaphore_mem>>) src(%101 : memref<1x128xf32, #tpu.memory_space<any>>) dst(%102 : memref<1x128xf32, #tpu.memory_space<vmem>>)
    %c6_i32_71 = arith.constant 6 : i32
    %c0_i32_72 = arith.constant 0 : i32
    %105 = tpu.memref_slice %arg3[%66, %c0_i32_72] : memref<64x128xf32, #tpu.memory_space<any>> -> memref<1x128xf32, #tpu.memory_space<any>>
    %c6_i32_73 = arith.constant 6 : i32
    %c0_i32_74 = arith.constant 0 : i32
    %106 = tpu.memref_slice %arg6[%c6_i32_73, %c0_i32_74] : memref<8x128xf32, #tpu.memory_space<vmem>> -> memref<1x128xf32, #tpu.memory_space<vmem>>
    %107 = tpu.memref_slice %arg7[%c6_i32_71] : memref<8x!tpu.dma_semaphore, #tpu.memory_space<semaphore_mem>> -> memref<1x!tpu.dma_semaphore, #tpu.memory_space<semaphore_mem>>
    %108 = tpu.memref_squeeze %107 : memref<1x!tpu.dma_semaphore, #tpu.memory_space<semaphore_mem>> -> memref<!tpu.dma_semaphore, #tpu.memory_space<semaphore_mem>>
    tpu.wait_dma2 semaphore(%108 : memref<!tpu.dma_semaphore, #tpu.memory_space<semaphore_mem>>) src(%105 : memref<1x128xf32, #tpu.memory_space<any>>) dst(%106 : memref<1x128xf32, #tpu.memory_space<vmem>>)
    %c7_i32_75 = arith.constant 7 : i32
    %c0_i32_76 = arith.constant 0 : i32
    %109 = tpu.memref_slice %arg3[%76, %c0_i32_76] : memref<64x128xf32, #tpu.memory_space<any>> -> memref<1x128xf32, #tpu.memory_space<any>>
    %c7_i32_77 = arith.constant 7 : i32
    %c0_i32_78 = arith.constant 0 : i32
    %110 = tpu.memref_slice %arg6[%c7_i32_77, %c0_i32_78] : memref<8x128xf32, #tpu.memory_space<vmem>> -> memref<1x128xf32, #tpu.memory_space<vmem>>
    %111 = tpu.memref_slice %arg7[%c7_i32_75] : memref<8x!tpu.dma_semaphore, #tpu.memory_space<semaphore_mem>> -> memref<1x!tpu.dma_semaphore, #tpu.memory_space<semaphore_mem>>
    %112 = tpu.memref_squeeze %111 : memref<1x!tpu.dma_semaphore, #tpu.memory_space<semaphore_mem>> -> memref<!tpu.dma_semaphore, #tpu.memory_space<semaphore_mem>>
    tpu.wait_dma2 semaphore(%112 : memref<!tpu.dma_semaphore, #tpu.memory_space<semaphore_mem>>) src(%109 : memref<1x128xf32, #tpu.memory_space<any>>) dst(%110 : memref<1x128xf32, #tpu.memory_space<vmem>>)
    %c0 = arith.constant 0 : index
    %c0_79 = arith.constant 0 : index
    %113 = vector.load %arg6[%c0, %c0_79] : memref<8x128xf32, #tpu.memory_space<vmem>>, vector<8x128xf32>
    %c0_80 = arith.constant 0 : index
    %c0_81 = arith.constant 0 : index
    %114 = vector.load %arg4[%c0_80, %c0_81] : memref<8x128xf32, #tpu.memory_space<vmem>>, vector<8x128xf32>
    %115 = arith.addf %113, %114 : vector<8x128xf32>
    %cst = arith.constant 11.3137083 : f32
    %116 = vector.broadcast %cst : f32 to vector<8x128xf32>
    %117 = arith.mulf %115, %116 : vector<8x128xf32>
    %c0_82 = arith.constant 0 : index
    %c0_83 = arith.constant 0 : index
    %c0_84 = arith.constant 0 : index
    %118 = vector.load %arg5[%c0_82, %c0_83, %c0_84] : memref<1x8x128xf32, #tpu.memory_space<vmem>>, vector<1x8x128xf32>
    %119 = vector.shape_cast %118 : vector<1x8x128xf32> to vector<8x128xf32>
    %120 = vector.shape_cast %117 : vector<8x128xf32> to vector<1x8x128xf32>
    tpu.vector_store %arg5[%c0_82, %c0_83, %c0_84], %120 {strides = array<i32>} : memref<1x8x128xf32, #tpu.memory_space<vmem>>, vector<1x8x128xf32>,
    return
  }
  func.func @transform_1(%arg0: i32, %arg1: i32, %arg2: memref<2x8xi32, #tpu.memory_space<smem>>) -> (i32, i32) {
    %c0_i32 = arith.constant 0 : i32
    %c0_i32_0 = arith.constant 0 : i32
    return %arg1, %c0_i32 : i32, i32
  }
  func.func @transform_2(%arg0: i32, %arg1: i32, %arg2: memref<2x8xi32, #tpu.memory_space<smem>>) -> (i32, i32, i32) {
    %c0_i32 = arith.constant 0 : i32
    %c0_i32_0 = arith.constant 0 : i32
    return %arg0, %arg1, %c0_i32 : i32, i32, i32
  }
}

</mosaic_0001>

<llo_original>
// kernel: tpu_custom_call.1
$region0: #{tpu_custom_call.1}
  #allocation0 [shape = 'u32[]', space=smem, size = 0x4, offset = 0x4, fixed_abs, tag = 'smem constant byte address 0x4 - core index']
  #allocation1 [shape = 'u32[144,128]{1,0:T(1,128)}', space=vmem, size = 0x12000, scoped, tag = 'internal scratch']
  #allocation2 [shape = 'f32[8,128]{1,0:T(8,128)}', space=vmem, size = 0x1000, scoped, tag = 'scratch operand']
  #allocation3 [shape = 's32[8]{0}', space=sflag, size = 0x20, scoped, tag = 'scratch operand']
  #allocation4 [shape = 's32[1]{0}', space=sflag, size = 0x4, scoped, tag = 'scoped memory for tpu_custom_call.1']
  #allocation5 [shape = 'u8[1024]{0}', space=smem, size = 0x400, scoped, tag = 'prefetched SMEM operand 0']
  #allocation10 [shape = 's32[]', space=sflag, size = 0x4, offset = 0, fixed_abs, tag = 'sflag constant byte address 0x0 - dummy sync flag']
  #allocation11 [shape = 's32[]', space=sflag, size = 0x4, offset = 0, fixed_abs, tag = 'sflag constant byte address 0x0 - dummy sync flag']
  #allocation12 [shape = 'u32[]', space=smem, size = 0x4, offset = 0x44, fixed_abs, tag = 'smem constant byte address 0x44 - assertion arg 0']
  #allocation13 [shape = 'u32[]', space=smem, size = 0x4, offset = 0x48, fixed_abs, tag = 'smem constant byte address 0x48 - assertion arg 1']
  #allocation14 [shape = 's32[]', space=sflag, size = 0x4, offset = 0, fixed_abs, tag = 'sflag constant byte address 0x0 - dummy sync flag']
  #allocation15 [shape = 's32[]', space=sflag, size = 0x4, offset = 0, fixed_abs, tag = 'sflag constant byte address 0x0 - dummy sync flag']
  #allocation16 [shape = 's32[]', space=sflag, size = 0x4, offset = 0, fixed_abs, tag = 'sflag constant byte address 0x0 - dummy sync flag']
  #allocation17 [shape = 's32[]', space=sflag, size = 0x4, offset = 0, fixed_abs, tag = 'sflag constant byte address 0x0 - dummy sync flag']
  #allocation18 [shape = 's32[]', space=sflag, size = 0x4, offset = 0, fixed_abs, tag = 'sflag constant byte address 0x0 - dummy sync flag']
  #allocation19 [shape = 's32[]', space=sflag, size = 0x4, offset = 0, fixed_abs, tag = 'sflag constant byte address 0x0 - dummy sync flag']
  #allocation20 [shape = 's32[]', space=sflag, size = 0x4, offset = 0, fixed_abs, tag = 'sflag constant byte address 0x0 - dummy sync flag']
  #allocation21 [shape = 's32[]', space=sflag, size = 0x4, offset = 0, fixed_abs, tag = 'sflag constant byte address 0x0 - dummy sync flag']
  #allocation22 [shape = 's32[]', space=sflag, size = 0x4, offset = 0, fixed_abs, tag = 'sflag constant byte address 0x0 - dummy sync flag']
  #allocation23 [shape = 's32[]', space=sflag, size = 0x4, offset = 0, fixed_abs, tag = 'sflag constant byte address 0x0 - dummy sync flag']
  #allocation24 [shape = 's32[]', space=sflag, size = 0x4, offset = 0, fixed_abs, tag = 'sflag constant byte address 0x0 - dummy sync flag']
  #allocation25 [shape = 's32[]', space=sflag, size = 0x4, offset = 0, fixed_abs, tag = 'sflag constant byte address 0x0 - dummy sync flag']
  #allocation26 [shape = 's32[]', space=sflag, size = 0x4, offset = 0, fixed_abs, tag = 'sflag constant byte address 0x0 - dummy sync flag']
  #allocation27 [shape = 's32[]', space=sflag, size = 0x4, offset = 0, fixed_abs, tag = 'sflag constant byte address 0x0 - dummy sync flag']
  %s0 = inlined_call_operand.hbm [shape: s32[2,8], index: 0, kind: input, shape index: {}]
  %s1 = inlined_call_operand.hbm [shape: f32[64,128], index: 1, kind: input, shape index: {}]
  %s2 = inlined_call_operand.hbm [shape: f32[8,128], index: 2, kind: input, shape index: {}]
  %s3 = inlined_call_operand.hbm [shape: f32[2,8,128], index: 3, kind: output, shape index: {}]
  %s4 = sld [smem:[#allocation0]]
  $region73: #{tpu_custom_call.1} parent=0
    _
  %s6 = ssub.s32 1, %s4
  %s7 = scalar_select 0, %s6, %s4
  %9 = dma.hbm_to_smem %s0, 32, [#allocation5], [#allocation4]
  %10 = dma.done [#allocation4], 32
  %11 = sfence
  $region1: #{tpu_custom_call.1} parent=0
    #allocation6 [shape = 'u8[4096]{0}', space=vmem, size = 0x1000, scoped, tag = 'input window, operand 2, single buffered']
    #allocation7 [shape = 's32[2]{0}', space=sflag, size = 0x8, scoped, tag = 'scoped memory for tpu_custom_call.1']
    #allocation8 [shape = 's32[2]{0}', space=sflag, size = 0x8, scoped, tag = 'scoped memory for tpu_custom_call.1']
    #allocation9 [shape = 'u8[8192]{0}', space=vmem, size = 0x2000, scoped, tag = 'output window, operand 0']
    %12 = vsyncpa [#allocation7], 0
    %13 = vsyncpa [#allocation8], 0
    %s14 = scalar_lea.sflag [#allocation8], 1
    %15 = vsyncpa %s14, 0
    loop: start=0, step=1, limit=4
    $region2: #{tpu_custom_call.1} parent=1 // loop_pre_header
      _
    $region3: #{tpu_custom_call.1} parent=1 // loop_header
      %s17 = sphi 0, %s21
      %p18 = scmp.ge.s32.totalorder %s17, 4
      %s24 = sphi 0, %s36
      %s25 = sphi 0, %s32
      %s26 = sphi 0, %s24
      %s27 = sphi 0, %s25
      %s28 = sphi 0, %s26
      %s29 = sphi 0, %s27
      %s39 = sphi 0, %s41
      %s42 = sphi 0, %s39
      %s43 = sphi 0, %s42
      %s59 = sphi 0, %s43
      %s67 = sphi 0, %s69
      %s70 = sphi 0, %s67
      %s71 = sphi 0, %s70
      %s87 = sphi 0, %s71
    $region4: #{tpu_custom_call.1} parent=1 // loop_header_branch
      %20 = sbr.rel (%p18) target = $region8
    $region5: #{tpu_custom_call.1} parent=1 // loop_body
      %s22 = ssub.s32 %s17, 1
      %s23 = ssub.s32 %s17, 2
      %s30 = sadd.s32 1, %s25
      %p31 = scmp.ge.s32.totalorder %s30, 1
      %s32 = scalar_select %p31, 0, %s30
      %s33 = sadd.s32 1, %s24
      %s34 = scalar_select %p31, %s33, %s24
      %p35 = scmp.ge.s32.totalorder %s34, 2
      %s36 = scalar_select %p35, 0, %s34
      %s37 = ssub.s32 %s25, %s32
      %p38 = scmp.eq.s32.totalorder %s37, 0
      %s40 = sadd.s32 %s39, 1
      %s41 = scalar_select %p38, %s39, %s40
      %p44 = pneg %p38
      %p45 = scmp.eq.s32.totalorder %s17, 1
      %p46 = por %p44, %p45
      %p47 = scmp.ne.s32.totalorder %s39, %s42
      %p48 = scmp.eq.s32.totalorder %s17, 0
      %p49 = por %p47, %p48
      %p50 = scmp.ne.s32.totalorder %s39, %s42
      %p51 = scmp.eq.s32.totalorder %s22, 1
      %p52 = por %p50, %p51
      %p53 = scmp.ne.s32.totalorder %s42, %s43
      %p54 = scmp.eq.s32.totalorder %s22, 0
      %p55 = por %p53, %p54
      %p56 = scmp.ne.s32.totalorder %s42, %s43
      %p57 = scmp.eq.s32.totalorder %s23, 1
      %p58 = por %p56, %p57
      %p60 = scmp.ne.s32.totalorder %s43, %s59
      %p61 = scmp.eq.s32.totalorder %s23, 0
      %p62 = por %p60, %p61
      %s63 = ssub.s32 %s24, %s36
      %s64 = ssub.s32 %s25, %s32
      %s65 = sor.u32 %s63, %s64
      %p66 = scmp.eq.s32.totalorder %s65, 0
      %s68 = sadd.s32 %s67, 1
      %s69 = scalar_select %p66, %s67, %s68
      %p72 = pneg %p66
      %p73 = scmp.eq.s32.totalorder %s17, 1
      %p74 = por %p72, %p73
      %p75 = scmp.ne.s32.totalorder %s67, %s70
      %p76 = scmp.eq.s32.totalorder %s17, 0
      %p77 = por %p75, %p76
      %p78 = scmp.ne.s32.totalorder %s67, %s70
      %p79 = scmp.eq.s32.totalorder %s22, 1
      %p80 = por %p78, %p79
      %p81 = scmp.ne.s32.totalorder %s70, %s71
      %p82 = scmp.eq.s32.totalorder %s22, 0
      %p83 = por %p81, %p82
      %p84 = scmp.ne.s32.totalorder %s70, %s71
      %p85 = scmp.eq.s32.totalorder %s23, 1
      %p86 = por %p84, %p85
      %p88 = scmp.ne.s32.totalorder %s71, %s87
      %p89 = scmp.eq.s32.totalorder %s23, 0
      %p90 = por %p88, %p89
      %p91 = scmp.le.s32.totalorder 1, %s17
      %p92 = scmp.lt.s32.totalorder %s17, 3
      %p93 = pnand %p91, %p92
      %p94 = pneg %p93
      // Predicated region
      $region9: #{tpu_custom_call.1} parent=5 // pred_check
        _
      $region10: #{tpu_custom_call.1} parent=5 // pred_check_branch
        %96 = sbr.rel (%p93) target = $region12
      $region11: #{tpu_custom_call.1} parent=5 // pred_region
        %s97 = ssub.s32 %s17, 1
        // Predicated region
        $region13: #{tpu_custom_call.1} parent=11 // pred_check
          %p98 = pneg %p55
        $region14: #{tpu_custom_call.1} parent=11 // pred_check_branch
          %100 = sbr.rel (%p98) target = $region16
        $region15: #{tpu_custom_call.1} parent=11 // pred_region
          %s102 = ssub.s32 128, 128
          %103 = vsyncadd [#allocation7], %s102
          %s104 = smul.addr %s27, 128
          %s105 = scalar_lea.hbm %s2, %s104
          %s107 = sshll.u32 [#allocation6], 4
          %s108 = int_to_ptr.vmem [resolvable:$true] %s107
          %110 = dma.hbm_to_vmem [thread:$0]  %s105, 128, %s108, [#allocation7]
        $region16: #{tpu_custom_call.1} parent=11 // pred_fallthru
          _
      $region12: #{tpu_custom_call.1} parent=5 // pred_fallthru
        _
      %p111 = scmp.lt.s32.totalorder %s17, 2
      // Predicated region
      $region17: #{tpu_custom_call.1} parent=5 // pred_check
        %p112 = pneg %p111
      $region18: #{tpu_custom_call.1} parent=5 // pred_check_branch
        %114 = sbr.rel (%p112) target = $region20
      $region19: #{tpu_custom_call.1} parent=5 // pred_region
        _
      $region20: #{tpu_custom_call.1} parent=5 // pred_fallthru
        _
      %p115 = scmp.le.s32.totalorder 1, %s17
      %p116 = scmp.lt.s32.totalorder %s17, 3
      %p117 = pnand %p115, %p116
      %p118 = pneg %p117
      // Predicated region
      $region21: #{tpu_custom_call.1} parent=5 // pred_check
        _
      $region22: #{tpu_custom_call.1} parent=5 // pred_check_branch
        %120 = sbr.rel (%p117) target = $region24
      $region23: #{tpu_custom_call.1} parent=5 // pred_region
        %s121 = ssub.s32 %s17, 1
        // Predicated region
        $region25: #{tpu_custom_call.1} parent=23 // pred_check
          %p122 = pneg %p55
        $region26: #{tpu_custom_call.1} parent=23 // pred_check_branch
          %124 = sbr.rel (%p122) target = $region28
        $region27: #{tpu_custom_call.1} parent=23 // pred_region
          %125 = dma.done [#allocation7], 128
        $region28: #{tpu_custom_call.1} parent=23 // pred_fallthru
          _
        %p126 = pneg %p55
        %p127 = pneg %p52
        %p128 = pneg %p83
        %p129 = pneg %p80
        %s130 = sand.u32 %s70, 1
        %s131 = scalar_lea.sflag [#allocation8], %s130
        %s132 = sand.u32 %s70, 1
        %s133 = smul.addr %s132, 8
        %s134 = scalar_lea.vmem [#allocation9], %s133
        %s135 = smul.u32 %s27, 8
        %s136 = sshra.s32 %s135, 7
        %s137 = sand.u32 %s135, 127
        %s138 = sadd.s32 %s136, %s26
        %s139 = smul.u32 %s138, 128
        %s140 = sshra.s32 %s135, 7
        %s141 = sand.u32 %s135, 127
        %s142 = sadd.s32 %s139, %s141
        %s143 = sld [smem:[#allocation5 + %s142]]
        %p144 = scmp.gt.s32.totalorder %s143, 0
        %s145 = scalar_select %p144, %s143, 0
        %p146 = scmp.lt.s32.totalorder %s145, 63
        %s147 = scalar_select %p146, %s145, 63
        %s148 = smul.addr %s147, 16
        %s149 = scalar_lea.hbm %s1, %s148
        // Predicated region
        $region29: #{tpu_custom_call.1} parent=23 // pred_check
          _
        $region30: #{tpu_custom_call.1} parent=23 // pred_check_branch
          %151 = sbr.rel target = $region32
        $region31: #{tpu_custom_call.1} parent=23 // pred_region
          %152 = sst [smem:[#allocation12]] [#allocation11]
          %153 = sst [smem:[#allocation13]] [#allocation10]
        $region32: #{tpu_custom_call.1} parent=23 // pred_fallthru
          _
        %155 = shalt.err (0)
        %s157 = sshll.u32 [#allocation2], 4
        %s158 = int_to_ptr.vmem [resolvable:$true] %s157
        %160 = dma.hbm_to_vmem [thread:$0]  %s149, 16, %s158, [#allocation3]
        %s161 = sadd.s32 %s135, 1
        %s162 = sshra.s32 %s161, 7
        %s163 = sand.u32 %s161, 127
        %s164 = sadd.s32 %s162, %s26
        %s165 = smul.u32 %s164, 128
        %s166 = sshra.s32 %s161, 7
        %s167 = sand.u32 %s161, 127
        %s168 = sadd.s32 %s165, %s167
        %s169 = sld [smem:[#allocation5 + %s168]]
        %p170 = scmp.gt.s32.totalorder %s169, 0
        %s171 = scalar_select %p170, %s169, 0
        %p172 = scmp.lt.s32.totalorder %s171, 63
        %s173 = scalar_select %p172, %s171, 63
        %s174 = smul.addr %s173, 16
        %s175 = scalar_lea.hbm %s1, %s174
        %s176 = scalar_lea.vmem [#allocation2], 1
        %s177 = scalar_lea.sflag [#allocation3], 1
        // Predicated region
        $region33: #{tpu_custom_call.1} parent=23 // pred_check
          _
        $region34: #{tpu_custom_call.1} parent=23 // pred_check_branch
          %179 = sbr.rel target = $region36
        $region35: #{tpu_custom_call.1} parent=23 // pred_region
          %180 = sst [smem:[#allocation12]] [#allocation15]
          %181 = sst [smem:[#allocation13]] [#allocation14]
        $region36: #{tpu_custom_call.1} parent=23 // pred_fallthru
          _
        %183 = shalt.err (0)
        %s185 = sshll.u32 %s176, 4
        %s186 = int_to_ptr.vmem [resolvable:$true] %s185
        %188 = dma.hbm_to_vmem [thread:$0]  %s175, 16, %s186, %s177
        %s189 = sadd.s32 %s135, 2
        %s190 = sshra.s32 %s189, 7
        %s191 = sand.u32 %s189, 127
        %s192 = sadd.s32 %s190, %s26
        %s193 = smul.u32 %s192, 128
        %s194 = sshra.s32 %s189, 7
        %s195 = sand.u32 %s189, 127
        %s196 = sadd.s32 %s193, %s195
        %s197 = sld [smem:[#allocation5 + %s196]]
        %p198 = scmp.gt.s32.totalorder %s197, 0
        %s199 = scalar_select %p198, %s197, 0
        %p200 = scmp.lt.s32.totalorder %s199, 63
        %s201 = scalar_select %p200, %s199, 63
        %s202 = smul.addr %s201, 16
        %s203 = scalar_lea.hbm %s1, %s202
        %s204 = scalar_lea.vmem [#allocation2], 2
        %s205 = scalar_lea.sflag [#allocation3], 2
        // Predicated region
        $region37: #{tpu_custom_call.1} parent=23 // pred_check
          _
        $region38: #{tpu_custom_call.1} parent=23 // pred_check_branch
          %207 = sbr.rel target = $region40
        $region39: #{tpu_custom_call.1} parent=23 // pred_region
          %208 = sst [smem:[#allocation12]] [#allocation17]
          %209 = sst [smem:[#allocation13]] [#allocation16]
        $region40: #{tpu_custom_call.1} parent=23 // pred_fallthru
          _
        %211 = shalt.err (0)
        %s213 = sshll.u32 %s204, 4
        %s214 = int_to_ptr.vmem [resolvable:$true] %s213
        %216 = dma.hbm_to_vmem [thread:$0]  %s203, 16, %s214, %s205
        %s217 = sadd.s32 %s135, 3
        %s218 = sshra.s32 %s217, 7
        %s219 = sand.u32 %s217, 127
        %s220 = sadd.s32 %s218, %s26
        %s221 = smul.u32 %s220, 128
        %s222 = sshra.s32 %s217, 7
        %s223 = sand.u32 %s217, 127
        %s224 = sadd.s32 %s221, %s223
        %s225 = sld [smem:[#allocation5 + %s224]]
        %p226 = scmp.gt.s32.totalorder %s225, 0
        %s227 = scalar_select %p226, %s225, 0
        %p228 = scmp.lt.s32.totalorder %s227, 63
        %s229 = scalar_select %p228, %s227, 63
        %s230 = smul.addr %s229, 16
        %s231 = scalar_lea.hbm %s1, %s230
        %s232 = scalar_lea.vmem [#allocation2], 3
        %s233 = scalar_lea.sflag [#allocation3], 3
        // Predicated region
        $region41: #{tpu_custom_call.1} parent=23 // pred_check
          _
        $region42: #{tpu_custom_call.1} parent=23 // pred_check_branch
          %235 = sbr.rel target = $region44
        $region43: #{tpu_custom_call.1} parent=23 // pred_region
          %236 = sst [smem:[#allocation12]] [#allocation19]
          %237 = sst [smem:[#allocation13]] [#allocation18]
        $region44: #{tpu_custom_call.1} parent=23 // pred_fallthru
          _
        %239 = shalt.err (0)
        %s241 = sshll.u32 %s232, 4
        %s242 = int_to_ptr.vmem [resolvable:$true] %s241
        %244 = dma.hbm_to_vmem [thread:$0]  %s231, 16, %s242, %s233
        %s245 = sadd.s32 %s135, 4
        %s246 = sshra.s32 %s245, 7
        %s247 = sand.u32 %s245, 127
        %s248 = sadd.s32 %s246, %s26
        %s249 = smul.u32 %s248, 128
        %s250 = sshra.s32 %s245, 7
        %s251 = sand.u32 %s245, 127
        %s252 = sadd.s32 %s249, %s251
        %s253 = sld [smem:[#allocation5 + %s252]]
        %p254 = scmp.gt.s32.totalorder %s253, 0
        %s255 = scalar_select %p254, %s253, 0
        %p256 = scmp.lt.s32.totalorder %s255, 63
        %s257 = scalar_select %p256, %s255, 63
        %s258 = smul.addr %s257, 16
        %s259 = scalar_lea.hbm %s1, %s258
        %s260 = scalar_lea.vmem [#allocation2], 4
        %s261 = scalar_lea.sflag [#allocation3], 4
        // Predicated region
        $region45: #{tpu_custom_call.1} parent=23 // pred_check
          _
        $region46: #{tpu_custom_call.1} parent=23 // pred_check_branch
          %263 = sbr.rel target = $region48
        $region47: #{tpu_custom_call.1} parent=23 // pred_region
          %264 = sst [smem:[#allocation12]] [#allocation21]
          %265 = sst [smem:[#allocation13]] [#allocation20]
        $region48: #{tpu_custom_call.1} parent=23 // pred_fallthru
          _
        %267 = shalt.err (0)
        %s269 = sshll.u32 %s260, 4
        %s270 = int_to_ptr.vmem [resolvable:$true] %s269
        %272 = dma.hbm_to_vmem [thread:$0]  %s259, 16, %s270, %s261
        %s273 = sadd.s32 %s135, 5
        %s274 = sshra.s32 %s273, 7
        %s275 = sand.u32 %s273, 127
        %s276 = sadd.s32 %s274, %s26
        %s277 = smul.u32 %s276, 128
        %s278 = sshra.s32 %s273, 7
        %s279 = sand.u32 %s273, 127
        %s280 = sadd.s32 %s277, %s279
        %s281 = sld [smem:[#allocation5 + %s280]]
        %p282 = scmp.gt.s32.totalorder %s281, 0
        %s283 = scalar_select %p282, %s281, 0
        %p284 = scmp.lt.s32.totalorder %s283, 63
        %s285 = scalar_select %p284, %s283, 63
        %s286 = smul.addr %s285, 16
        %s287 = scalar_lea.hbm %s1, %s286
        %s288 = scalar_lea.vmem [#allocation2], 5
        %s289 = scalar_lea.sflag [#allocation3], 5
        // Predicated region
        $region49: #{tpu_custom_call.1} parent=23 // pred_check
          _
        $region50: #{tpu_custom_call.1} parent=23 // pred_check_branch
          %291 = sbr.rel target = $region52
        $region51: #{tpu_custom_call.1} parent=23 // pred_region
          %292 = sst [smem:[#allocation12]] [#allocation23]
          %293 = sst [smem:[#allocation13]] [#allocation22]
        $region52: #{tpu_custom_call.1} parent=23 // pred_fallthru
          _
        %295 = shalt.err (0)
        %s297 = sshll.u32 %s288, 4
        %s298 = int_to_ptr.vmem [resolvable:$true] %s297
        %300 = dma.hbm_to_vmem [thread:$0]  %s287, 16, %s298, %s289
        %s301 = sadd.s32 %s135, 6
        %s302 = sshra.s32 %s301, 7
        %s303 = sand.u32 %s301, 127
        %s304 = sadd.s32 %s302, %s26
        %s305 = smul.u32 %s304, 128
        %s306 = sshra.s32 %s301, 7
        %s307 = sand.u32 %s301, 127
        %s308 = sadd.s32 %s305, %s307
        %s309 = sld [smem:[#allocation5 + %s308]]
        %p310 = scmp.gt.s32.totalorder %s309, 0
        %s311 = scalar_select %p310, %s309, 0
        %p312 = scmp.lt.s32.totalorder %s311, 63
        %s313 = scalar_select %p312, %s311, 63
        %s314 = smul.addr %s313, 16
        %s315 = scalar_lea.hbm %s1, %s314
        %s316 = scalar_lea.vmem [#allocation2], 6
        %s317 = scalar_lea.sflag [#allocation3], 6
        // Predicated region
        $region53: #{tpu_custom_call.1} parent=23 // pred_check
          _
        $region54: #{tpu_custom_call.1} parent=23 // pred_check_branch
          %319 = sbr.rel target = $region56
        $region55: #{tpu_custom_call.1} parent=23 // pred_region
          %320 = sst [smem:[#allocation12]] [#allocation25]
          %321 = sst [smem:[#allocation13]] [#allocation24]
        $region56: #{tpu_custom_call.1} parent=23 // pred_fallthru
          _
        %323 = shalt.err (0)
        %s325 = sshll.u32 %s316, 4
        %s326 = int_to_ptr.vmem [resolvable:$true] %s325
        %328 = dma.hbm_to_vmem [thread:$0]  %s315, 16, %s326, %s317
        %s329 = sadd.s32 %s135, 7
        %s330 = sshra.s32 %s329, 7
        %s331 = sand.u32 %s329, 127
        %s332 = sadd.s32 %s330, %s26
        %s333 = smul.u32 %s332, 128
        %s334 = sshra.s32 %s329, 7
        %s335 = sand.u32 %s329, 127
        %s336 = sadd.s32 %s333, %s335
        %s337 = sld [smem:[#allocation5 + %s336]]
        %p338 = scmp.gt.s32.totalorder %s337, 0
        %s339 = scalar_select %p338, %s337, 0
        %p340 = scmp.lt.s32.totalorder %s339, 63
        %s341 = scalar_select %p340, %s339, 63
        %s342 = smul.addr %s341, 16
        %s343 = scalar_lea.hbm %s1, %s342
        %s344 = scalar_lea.vmem [#allocation2], 7
        %s345 = scalar_lea.sflag [#allocation3], 7
        // Predicated region
        $region57: #{tpu_custom_call.1} parent=23 // pred_check
          _
        $region58: #{tpu_custom_call.1} parent=23 // pred_check_branch
          %347 = sbr.rel target = $region60
        $region59: #{tpu_custom_call.1} parent=23 // pred_region
          %348 = sst [smem:[#allocation12]] [#allocation27]
          %349 = sst [smem:[#allocation13]] [#allocation26]
        $region60: #{tpu_custom_call.1} parent=23 // pred_fallthru
          _
        %351 = shalt.err (0)
        %s353 = sshll.u32 %s344, 4
        %s354 = int_to_ptr.vmem [resolvable:$true] %s353
        %356 = dma.hbm_to_vmem [thread:$0]  %s343, 16, %s354, %s345
        %s357 = smul.u32 1, 1
        %s358 = sshll.u32 %s357, 4
        %359 = dma.done [#allocation3], %s358
        %s360 = sshll.u32 %s357, 4
        %361 = dma.done %s177, %s360
        %s362 = sshll.u32 %s357, 4
        %363 = dma.done %s205, %s362
        %s364 = sshll.u32 %s357, 4
        %365 = dma.done %s233, %s364
        %s366 = sshll.u32 %s357, 4
        %367 = dma.done %s261, %s366
        %s368 = sshll.u32 %s357, 4
        %369 = dma.done %s289, %s368
        %s370 = sshll.u32 %s357, 4
        %371 = dma.done %s317, %s370
        %s372 = sshll.u32 %s357, 4
        %373 = dma.done %s345, %s372
        %v374 = vld [vmem:[#allocation2] sm:$0xff]
        %v375 = vld [vmem:[#allocation6] sm:$0xff]
        %v376 = vadd.f32 %v374, %v375
        %v377 = vmul.f32 %v376, 11.313708
        %378 = vst [vmem:[%s134] sm:$0xff] %v377
        %s379 = sand.u32 %s70, 1
        %s380 = scalar_lea.sflag [#allocation8], %s379
        %s381 = sand.u32 %s70, 1
        %s382 = smul.addr %s381, 8
        %s383 = scalar_lea.vmem [#allocation9], %s382
        // Predicated region
        $region61: #{tpu_custom_call.1} parent=23 // pred_check
          %p384 = pneg %p80
        $region62: #{tpu_custom_call.1} parent=23 // pred_check_branch
          %386 = sbr.rel (%p384) target = $region64
        $region63: #{tpu_custom_call.1} parent=23 // pred_region
          %s388 = ssub.s32 128, 128
          %389 = vsyncadd %s380, %s388
          %s390 = sadd.s32 %s27, %s26
          %s391 = smul.addr %s390, 128
          %s392 = scalar_lea.hbm %s3, %s391
          %s394 = sshll.u32 %s383, 4
          %s395 = int_to_ptr.vmem [resolvable:$true] %s394
          %397 = dma.vmem_to_hbm [thread:$0]  %s395, 128, %s392, %s380
        $region64: #{tpu_custom_call.1} parent=23 // pred_fallthru
          _
      $region24: #{tpu_custom_call.1} parent=5 // pred_fallthru
        _
      %p398 = scmp.le.s32.totalorder 2, %s17
      // Predicated region
      $region65: #{tpu_custom_call.1} parent=5 // pred_check
        %p399 = pneg %p398
      $region66: #{tpu_custom_call.1} parent=5 // pred_check_branch
        %401 = sbr.rel (%p399) target = $region68
      $region67: #{tpu_custom_call.1} parent=5 // pred_region
        %s402 = ssub.s32 %s17, 2
        // Predicated region
        $region69: #{tpu_custom_call.1} parent=67 // pred_check
          %p403 = pneg %p86
        $region70: #{tpu_custom_call.1} parent=67 // pred_check_branch
          %405 = sbr.rel (%p403) target = $region72
        $region71: #{tpu_custom_call.1} parent=67 // pred_region
          %s406 = sand.u32 %s71, 1
          %s407 = scalar_lea.sflag [#allocation8], %s406
          %s408 = sand.u32 %s71, 1
          %s409 = smul.addr %s408, 8
          %s410 = scalar_lea.vmem [#allocation9], %s409
          %411 = dma.done %s407, 128
        $region72: #{tpu_custom_call.1} parent=67 // pred_fallthru
          _
      $region68: #{tpu_custom_call.1} parent=5 // pred_fallthru
        _
    $region6: #{tpu_custom_call.1} parent=1 // loop_footer
      %s21 = sadd.s32 1, %s17
    $region7: #{tpu_custom_call.1} parent=1 // loop_footer_branch
      %16 = sbr.rel target = $region3
    $region8: #{tpu_custom_call.1} parent=1 // loop_exit
      _
    %412 = vsyncpa [#allocation7], 1
    %s413 = scalar_lea.sflag [#allocation7], 1
    %414 = vsyncpa %s413, 1
    %415 = vsyncpa [#allocation8], 1
    %s416 = scalar_lea.sflag [#allocation8], 1
    %417 = vsyncpa %s416, 1
  %418 = vsyncmov [#allocation3]
  %s419 = vpop.sfrf %418
  %p420 = scmp.eq.s32.totalorder %s419, 0
  %p421 = pneg %p420
  %423 = shalt.err (%p421)
  %s424 = scalar_lea.sflag [#allocation3], 1
  %425 = vsyncmov %s424
  %s426 = vpop.sfrf %425
  %p427 = scmp.eq.s32.totalorder %s426, 0
  %p428 = pneg %p427
  %430 = shalt.err (%p428)
  %s431 = scalar_lea.sflag [#allocation3], 2
  %432 = vsyncmov %s431
  %s433 = vpop.sfrf %432
  %p434 = scmp.eq.s32.totalorder %s433, 0
  %p435 = pneg %p434
  %437 = shalt.err (%p435)
  %s438 = scalar_lea.sflag [#allocation3], 3
  %439 = vsyncmov %s438
  %s440 = vpop.sfrf %439
  %p441 = scmp.eq.s32.totalorder %s440, 0
  %p442 = pneg %p441
  %444 = shalt.err (%p442)
  %s445 = scalar_lea.sflag [#allocation3], 4
  %446 = vsyncmov %s445
  %s447 = vpop.sfrf %446
  %p448 = scmp.eq.s32.totalorder %s447, 0
  %p449 = pneg %p448
  %451 = shalt.err (%p449)
  %s452 = scalar_lea.sflag [#allocation3], 5
  %453 = vsyncmov %s452
  %s454 = vpop.sfrf %453
  %p455 = scmp.eq.s32.totalorder %s454, 0
  %p456 = pneg %p455
  %458 = shalt.err (%p456)
  %s459 = scalar_lea.sflag [#allocation3], 6
  %460 = vsyncmov %s459
  %s461 = vpop.sfrf %460
  %p462 = scmp.eq.s32.totalorder %s461, 0
  %p463 = pneg %p462
  %465 = shalt.err (%p463)
  %s466 = scalar_lea.sflag [#allocation3], 7
  %467 = vsyncmov %s466
  %s468 = vpop.sfrf %467
  %p469 = scmp.eq.s32.totalorder %s468, 0
  %p470 = pneg %p469
  %472 = shalt.err (%p470)

</llo_original>
